<compile_context>
chip_gen: v7x
topology: tpu7x:2x2x1
jax: 0.10.0
libtpu: 0.0.40
codegen_flags: <defaults>
</compile_context>

<pallas_src>
import math
from functools import partial  # noqa: F401

import jax
import jax.numpy as jnp
from jax import lax
from jax.experimental import pallas as pl
from jax.experimental.pallas import tpu as pltpu


# ---------------------------------------------------------------------------
# Fused kernel: per (batch, row-block) grid step
#   x_ref    : (TH + K - 1, Wp*Cin)   padded input rows, lane-fused (W,Cin)
#   wbig_ref : (K, Wp*Cin, W*Cout)    fused pw1∘pw2∘dw weight (banded blocks)
#   b_ref    : (1, W*Cout)            depthwise bias tiled along lanes
#   o_ref    : (TH, W*Cout)           output rows, lane-fused (W,Cout)
# ---------------------------------------------------------------------------
def _bsconvs_fused_kernel(x_ref, wbig_ref, b_ref, o_ref):
    TH = o_ref.shape[0]
    K = wbig_ref.shape[0]
    x = x_ref[...]                      # (TH + K - 1, Wp*Cin)
    wbig = wbig_ref[...]                # (K, Wp*Cin, W*Cout)
    acc = jnp.zeros(o_ref.shape, jnp.float32)
    for kh in range(K):                 # K = 3 MXU matmul-accumulates
        acc = acc + jnp.dot(x[kh:kh + TH, :], wbig[kh],
                            preferred_element_type=jnp.float32)
    o_ref[...] = acc + b_ref[...]


def bsconvs_forward(x_nchw, w1, w2, w_dw, b_dw, *, tile_h=128):
    """BSConvS forward.  x_nchw: (N, Cin, H, W) float32.

    w1:   (Cin, Cmid)   -- pw1 weight (1x1, transposed)
    w2:   (Cmid, Cout)  -- pw2 weight (1x1, transposed)
    w_dw: (K, K, Cout)  -- depthwise weight per output channel
    b_dw: (Cout,)       -- depthwise bias
    """
    N, Cin, H, W = x_nchw.shape
    Cout = w2.shape[1]
    K = w_dw.shape[0]
    pad = (K - 1) // 2
    Wp = W + 2 * pad
    Wc = W * Cout

    TH = int(min(tile_h, H))            # row tile
    nb = pl.cdiv(H, TH)                 # number of row blocks
    THp = TH + 2 * pad                  # rows with halo
    h_extra = nb * TH - H               # extra bottom padding so H | nb*TH

    # --- offline weight fusion (tiny arrays, built once) --------------------
    # Exact pw1∘pw2 fold: no BN / nonlinearity between them in this config.
    w12 = jnp.dot(w1, w2)                                    # (Cin, Cout)
    # wbig[kh, q*Cin + c, w*Cout + d] = w12[c, d] * w_dw[kh, q - w, d]
    #   for 0 <= q - w < K, else 0   (q indexes padded W positions).
    q_idx = jnp.arange(Wp)[:, None, None]
    w_idx = jnp.arange(W)[None, :, None]
    kw_idx = jnp.arange(K)[None, None, :]
    sel = (q_idx == w_idx + kw_idx).astype(w12.dtype)        # (Wp, W, K)
    wbig = jnp.einsum("qwk,hkd,cd->hqcwd", sel, w_dw, w12)   # (K, Wp, Cin, W, Cout)
    wbig = wbig.reshape(K, Wp * Cin, Wc)
    b_dense = jnp.tile(b_dw, W).reshape(1, Wc)               # [0, w*Cout+d] = b[d]

    # --- activation prep: NCHW -> NHWC, zero pad (pw(0)=0, so padding x is
    # equivalent to padding fea), fuse (W, Cin) into the lane axis, and gather
    # overlapping row blocks so the halo is handled by plain Blocked tiling. --
    x_nhwc = jnp.transpose(x_nchw, (0, 2, 3, 1))
    xp = jnp.pad(x_nhwc, ((0, 0), (pad, pad + h_extra), (pad, pad), (0, 0)))
    xd = xp.reshape(N, nb * TH + 2 * pad, Wp * Cin)
    x_blocks = jnp.stack(
        [lax.dynamic_slice_in_dim(xd, i * TH, THp, axis=1) for i in range(nb)],
        axis=1)                                              # (N, nb, THp, Wp*Cin)

    out = pl.pallas_call(
        _bsconvs_fused_kernel,
        out_shape=jax.ShapeDtypeStruct((N, nb, TH, Wc), jnp.float32),
        grid=(N, nb),
        in_specs=[
            pl.BlockSpec((None, None, THp, Wp * Cin), lambda n, i: (n, i, 0, 0)),
            pl.BlockSpec((K, Wp * Cin, Wc), lambda n, i: (0, 0, 0)),
            pl.BlockSpec((1, Wc), lambda n, i: (0, 0)),
        ],
        out_specs=pl.BlockSpec((None, None, TH, Wc), lambda n, i: (n, i, 0, 0)),
        compiler_params=pltpu.CompilerParams(
            dimension_semantics=("parallel", "parallel")),
    )(x_blocks, wbig, b_dense)

    out = out.reshape(N, nb * TH, W, Cout)[:, :H]            # drop row padding
    return jnp.transpose(out, (0, 3, 1, 2))                  # NHWC -> NCHW


def _reference(x_nchw, w1, w2, w_dw, b_dw):
    """Pure-JAX reference matching the PyTorch module semantics."""
    N, Cin, H, W = x_nchw.shape
    Cout = w2.shape[1]
    K = w_dw.shape[0]
    x_nhwc = jnp.transpose(x_nchw, (0, 2, 3, 1))
    fea = (x_nhwc.reshape(-1, Cin) @ w1 @ w2).reshape(N, H, W, Cout)
    w_hwio = w_dw.reshape(K, K, 1, Cout)  # depthwise: in-per-group = 1
    out = lax.conv_general_dilated(
        fea, w_hwio, window_strides=(1, 1),
        padding=((1, 1), (1, 1)),
        dimension_numbers=("NHWC", "HWIO", "NHWC"),
        feature_group_count=Cout,
    ) + b_dw.reshape(1, 1, 1, Cout)
    return jnp.transpose(out, (0, 3, 1, 2))


if __name__ == "__main__":
    # Module config mirroring BSConvS(in_channels=4, out_channels=8)
    in_channels, out_channels = 4, 8
    p, min_mid_channels, kernel_size = 0.25, 4, 3
    mid_channels = min(in_channels,
                       max(min_mid_channels, math.ceil(p * in_channels)))  # -> 4

    N, H, W = 2, 16, 16

    key = jax.random.PRNGKey(0)
    k_x, k_w1, k_w2, k_dw, k_b = jax.random.split(key, 5)

    x = jax.random.normal(k_x, (N, in_channels, H, W), dtype=jnp.float32)

    # PyTorch parameter shapes, stored transposed for the kernels:
    #   pw1.weight: (mid, in, 1, 1)  -> w1 (in, mid)
    #   pw2.weight: (out, mid, 1, 1) -> w2 (mid, out)
    #   dw.weight:  (out, 1, K, K)   -> w_dw (K, K, out)
    #   dw.bias:    (out,)
    w1 = 0.1 * jax.random.normal(k_w1, (in_channels, mid_channels), dtype=jnp.float32)
    w2 = 0.1 * jax.random.normal(k_w2, (mid_channels, out_channels), dtype=jnp.float32)
    w_dw = 0.1 * jax.random.normal(k_dw, (kernel_size, kernel_size, out_channels),
                                   dtype=jnp.float32)
    b_dw = 0.1 * jax.random.normal(k_b, (out_channels,), dtype=jnp.float32)

    out = bsconvs_forward(x, w1, w2, w_dw, b_dw)
    out = jax.block_until_ready(out)

    ref = _reference(x, w1, w2, w_dw, b_dw)
    assert out.shape == (N, out_channels, H, W)
    assert jnp.allclose(out, ref, atol=1e-4, rtol=1e-4), \
        f"max abs err = {jnp.max(jnp.abs(out - ref))}"

    print("KERNEL_OK")
</pallas_src>

<mosaic_0001>
module attributes {stable_mosaic.version = 11 : i64} {
  func.func @_bsconvs_fused_kernel(%arg0: i32, %arg1: i32, %arg2: memref<1x1x18x72xf32, #tpu.memory_space<vmem>>, %arg3: memref<3x72x128xf32, #tpu.memory_space<vmem>>, %arg4: memref<1x128xf32, #tpu.memory_space<vmem>>, %arg5: memref<1x1x16x128xf32, #tpu.memory_space<vmem>>) attributes {dimension_semantics = [#tpu.dimension_semantics<parallel>, #tpu.dimension_semantics<parallel>], iteration_bounds = array<i64: 2, 1>, scalar_prefetch = 0 : i64, scratch_operands = 0 : i64, tpu.core_type = #tpu.core_type<tc>, window_params = [{transform_indices = @transform_0, window_bounds = array<i64: 1, 1, 18, 72>}, {pipeline_mode = #tpu.pipeline_mode<synchronous>, transform_indices = @transform_1, window_bounds = array<i64: 3, 72, 128>}, {pipeline_mode = #tpu.pipeline_mode<synchronous>, transform_indices = @transform_2, window_bounds = array<i64: 1, 128>}, {transform_indices = @transform_3, window_bounds = array<i64: 1, 1, 16, 128>}]} {
    %c0 = arith.constant 0 : index
    %c0_0 = arith.constant 0 : index
    %c0_1 = arith.constant 0 : index
    %c0_2 = arith.constant 0 : index
    %0 = vector.load %arg2[%c0, %c0_0, %c0_1, %c0_2] : memref<1x1x18x72xf32, #tpu.memory_space<vmem>>, vector<1x1x18x72xf32>
    %1 = vector.shape_cast %0 : vector<1x1x18x72xf32> to vector<18x72xf32>
    %c0_3 = arith.constant 0 : index
    %c0_4 = arith.constant 0 : index
    %c0_5 = arith.constant 0 : index
    %2 = vector.load %arg3[%c0_3, %c0_4, %c0_5] : memref<3x72x128xf32, #tpu.memory_space<vmem>>, vector<3x72x128xf32>
    %cst = arith.constant 0.000000e+00 : f32
    %3 = vector.broadcast %cst : f32 to vector<16x128xf32>
    %4 = vector.extract_strided_slice %1 {offsets = [0, 0], sizes = [16, 72], strides = [1, 1]} : vector<18x72xf32> to vector<16x72xf32>
    %5 = vector.extract_strided_slice %2 {offsets = [0, 0, 0], sizes = [1, 72, 128], strides = [1, 1, 1]} : vector<3x72x128xf32> to vector<1x72x128xf32>
    %6 = vector.shape_cast %5 : vector<1x72x128xf32> to vector<72x128xf32>
    %cst_6 = arith.constant dense<0.000000e+00> : vector<16x128xf32>
    %7 = tpu.matmul %4, %6, %cst_6 {dimension_numbers = #tpu.dot_dimension_numbers<[1], [0], [0], [1], [0, 0, 1, 1], [], []>} : vector<16x72xf32>, vector<72x128xf32>, vector<16x128xf32> -> vector<16x128xf32>
    %8 = arith.addf %3, %7 : vector<16x128xf32>
    %9 = vector.extract_strided_slice %1 {offsets = [1, 0], sizes = [16, 72], strides = [1, 1]} : vector<18x72xf32> to vector<16x72xf32>
    %10 = vector.extract_strided_slice %2 {offsets = [1, 0, 0], sizes = [1, 72, 128], strides = [1, 1, 1]} : vector<3x72x128xf32> to vector<1x72x128xf32>
    %11 = vector.shape_cast %10 : vector<1x72x128xf32> to vector<72x128xf32>
    %cst_7 = arith.constant dense<0.000000e+00> : vector<16x128xf32>
    %12 = tpu.matmul %9, %11, %cst_7 {dimension_numbers = #tpu.dot_dimension_numbers<[1], [0], [0], [1], [0, 0, 1, 1], [], []>} : vector<16x72xf32>, vector<72x128xf32>, vector<16x128xf32> -> vector<16x128xf32>
    %13 = arith.addf %8, %12 : vector<16x128xf32>
    %14 = vector.extract_strided_slice %1 {offsets = [2, 0], sizes = [16, 72], strides = [1, 1]} : vector<18x72xf32> to vector<16x72xf32>
    %15 = vector.extract_strided_slice %2 {offsets = [2, 0, 0], sizes = [1, 72, 128], strides = [1, 1, 1]} : vector<3x72x128xf32> to vector<1x72x128xf32>
    %16 = vector.shape_cast %15 : vector<1x72x128xf32> to vector<72x128xf32>
    %cst_8 = arith.constant dense<0.000000e+00> : vector<16x128xf32>
    %17 = tpu.matmul %14, %16, %cst_8 {dimension_numbers = #tpu.dot_dimension_numbers<[1], [0], [0], [1], [0, 0, 1, 1], [], []>} : vector<16x72xf32>, vector<72x128xf32>, vector<16x128xf32> -> vector<16x128xf32>
    %18 = arith.addf %13, %17 : vector<16x128xf32>
    %c0_9 = arith.constant 0 : index
    %c0_10 = arith.constant 0 : index
    %19 = vector.load %arg4[%c0_9, %c0_10] : memref<1x128xf32, #tpu.memory_space<vmem>>, vector<1x128xf32>
    %20 = vector.broadcast %19 : vector<1x128xf32> to vector<16x128xf32>
    %21 = arith.addf %18, %20 : vector<16x128xf32>
    %c0_11 = arith.constant 0 : index
    %c0_12 = arith.constant 0 : index
    %c0_13 = arith.constant 0 : index
    %c0_14 = arith.constant 0 : index
    %22 = vector.load %arg5[%c0_11, %c0_12, %c0_13, %c0_14] : memref<1x1x16x128xf32, #tpu.memory_space<vmem>>, vector<1x1x16x128xf32>
    %23 = vector.shape_cast %22 : vector<1x1x16x128xf32> to vector<16x128xf32>
    %24 = vector.shape_cast %21 : vector<16x128xf32> to vector<1x1x16x128xf32>
    tpu.vector_store %arg5[%c0_11, %c0_12, %c0_13, %c0_14], %24 {strides = array<i32>} : memref<1x1x16x128xf32, #tpu.memory_space<vmem>>, vector<1x1x16x128xf32>,
    return
  }
  func.func @transform_0(%arg0: i32, %arg1: i32) -> (i32, i32, i32, i32) {
    %c0_i32 = arith.constant 0 : i32
    %c0_i32_0 = arith.constant 0 : i32
    %c0_i32_1 = arith.constant 0 : i32
    return %arg0, %arg1, %c0_i32, %c0_i32_0 : i32, i32, i32, i32
  }
  func.func @transform_1(%arg0: i32, %arg1: i32) -> (i32, i32, i32) {
    %c0_i32 = arith.constant 0 : i32
    %c0_i32_0 = arith.constant 0 : i32
    %c0_i32_1 = arith.constant 0 : i32
    %c0_i32_2 = arith.constant 0 : i32
    return %c0_i32, %c0_i32_0, %c0_i32_1 : i32, i32, i32
  }
  func.func @transform_2(%arg0: i32, %arg1: i32) -> (i32, i32) {
    %c0_i32 = arith.constant 0 : i32
    %c0_i32_0 = arith.constant 0 : i32
    %c0_i32_1 = arith.constant 0 : i32
    return %c0_i32, %c0_i32_0 : i32, i32
  }
  func.func @transform_3(%arg0: i32, %arg1: i32) -> (i32, i32, i32, i32) {
    %c0_i32 = arith.constant 0 : i32
    %c0_i32_0 = arith.constant 0 : i32
    %c0_i32_1 = arith.constant 0 : i32
    return %arg0, %arg1, %c0_i32, %c0_i32_0 : i32, i32, i32, i32
  }
}

</mosaic_0001>

<llo_original>
// kernel: tpu_custom_call.1
$region0: #{tpu_custom_call.1}
  #allocation0 [shape = 'u32[]', space=smem, size = 0x4, offset = 0x4, fixed_abs, tag = 'smem constant byte address 0x4 - core index']
  #allocation1 [shape = 'u32[144,128]{1,0:T(1,128)}', space=vmem, size = 0x12000, scoped, tag = 'internal scratch']
  %s0 = inlined_call_operand.vmem [shape: f32[2,1,18,72], index: 0, kind: input, shape index: {}]
  %s1 = inlined_call_operand.hbm [shape: f32[3,72,128], index: 1, kind: input, shape index: {}]
  %s2 = inlined_call_operand.vmem [shape: f32[1,128], index: 2, kind: input, shape index: {}]
  %s3 = inlined_call_operand.hbm [shape: f32[2,1,16,128], index: 3, kind: output, shape index: {}]
  %s4 = sld [smem:[#allocation0]]
  $region49: #{tpu_custom_call.1} parent=0
    _
  %s6 = ssub.s32 1, %s4
  %s7 = scalar_select 0, %s6, %s4
  $region1: #{tpu_custom_call.1} parent=0
    #allocation2 [shape = 'u8[110592]{0}', space=vmem, size = 0x1b000, scoped, tag = 'input window, operand 1, single buffered']
    #allocation3 [shape = 's32[2]{0}', space=sflag, size = 0x8, scoped, tag = 'scoped memory for tpu_custom_call.1']
    #allocation4 [shape = 's32[2]{0}', space=sflag, size = 0x8, scoped, tag = 'scoped memory for tpu_custom_call.1']
    #allocation5 [shape = 'u8[16384]{0}', space=vmem, size = 0x4000, scoped, tag = 'output window, operand 0']
    %8 = vsyncpa [#allocation3], 0
    %9 = vsyncpa [#allocation4], 0
    %s10 = scalar_lea.sflag [#allocation4], 1
    %11 = vsyncpa %s10, 0
    loop: start=0, step=1, limit=4
    $region2: #{tpu_custom_call.1} parent=1 // loop_pre_header
      _
    $region3: #{tpu_custom_call.1} parent=1 // loop_header
      %s13 = sphi 0, %s17
      %p14 = scmp.ge.s32.totalorder %s13, 4
      %s20 = sphi 0, %s32
      %s21 = sphi 0, %s28
      %s22 = sphi 0, %s20
      %s23 = sphi 0, %s21
      %s24 = sphi 0, %s22
      %s25 = sphi 0, %s23
      %s37 = sphi 0, %s39
      %s40 = sphi 0, %s37
      %s41 = sphi 0, %s40
      %s57 = sphi 0, %s41
      %s61 = sphi 0, %s61
      %s63 = sphi 0, %s61
      %s64 = sphi 0, %s63
      %s78 = sphi 0, %s64
      %s82 = sphi 0, %s82
      %s84 = sphi 0, %s82
      %s85 = sphi 0, %s84
      %s99 = sphi 0, %s85
      %s107 = sphi 0, %s109
      %s110 = sphi 0, %s107
      %s111 = sphi 0, %s110
      %s127 = sphi 0, %s111
    $region4: #{tpu_custom_call.1} parent=1 // loop_header_branch
      %16 = sbr.rel (%p14) target = $region8
    $region5: #{tpu_custom_call.1} parent=1 // loop_body
      %s18 = ssub.s32 %s13, 1
      %s19 = ssub.s32 %s13, 2
      %s26 = sadd.s32 1, %s21
      %p27 = scmp.ge.s32.totalorder %s26, 1
      %s28 = scalar_select %p27, 0, %s26
      %s29 = sadd.s32 1, %s20
      %s30 = scalar_select %p27, %s29, %s20
      %p31 = scmp.ge.s32.totalorder %s30, 2
      %s32 = scalar_select %p31, 0, %s30
      %s33 = ssub.s32 %s20, %s32
      %s34 = ssub.s32 %s21, %s28
      %s35 = sor.u32 %s33, %s34
      %p36 = scmp.eq.s32.totalorder %s35, 0
      %s38 = sadd.s32 %s37, 1
      %s39 = scalar_select %p36, %s37, %s38
      %p42 = pneg %p36
      %p43 = scmp.eq.s32.totalorder %s13, 1
      %p44 = por %p42, %p43
      %p45 = scmp.ne.s32.totalorder %s37, %s40
      %p46 = scmp.eq.s32.totalorder %s13, 0
      %p47 = por %p45, %p46
      %p48 = scmp.ne.s32.totalorder %s37, %s40
      %p49 = scmp.eq.s32.totalorder %s18, 1
      %p50 = por %p48, %p49
      %p51 = scmp.ne.s32.totalorder %s40, %s41
      %p52 = scmp.eq.s32.totalorder %s18, 0
      %p53 = por %p51, %p52
      %p54 = scmp.ne.s32.totalorder %s40, %s41
      %p55 = scmp.eq.s32.totalorder %s19, 1
      %p56 = por %p54, %p55
      %p58 = scmp.ne.s32.totalorder %s41, %s57
      %p59 = scmp.eq.s32.totalorder %s19, 0
      %p60 = por %p58, %p59
      %s62 = sadd.s32 %s61, 1
      %p65 = scmp.eq.s32.totalorder %s13, 1
      %p66 = scmp.ne.s32.totalorder %s61, %s63
      %p67 = scmp.eq.s32.totalorder %s13, 0
      %p68 = por %p66, %p67
      %p69 = scmp.ne.s32.totalorder %s61, %s63
      %p70 = scmp.eq.s32.totalorder %s18, 1
      %p71 = por %p69, %p70
      %p72 = scmp.ne.s32.totalorder %s63, %s64
      %p73 = scmp.eq.s32.totalorder %s18, 0
      %p74 = por %p72, %p73
      %p75 = scmp.ne.s32.totalorder %s63, %s64
      %p76 = scmp.eq.s32.totalorder %s19, 1
      %p77 = por %p75, %p76
      %p79 = scmp.ne.s32.totalorder %s64, %s78
      %p80 = scmp.eq.s32.totalorder %s19, 0
      %p81 = por %p79, %p80
      %s83 = sadd.s32 %s82, 1
      %p86 = scmp.eq.s32.totalorder %s13, 1
      %p87 = scmp.ne.s32.totalorder %s82, %s84
      %p88 = scmp.eq.s32.totalorder %s13, 0
      %p89 = por %p87, %p88
      %p90 = scmp.ne.s32.totalorder %s82, %s84
      %p91 = scmp.eq.s32.totalorder %s18, 1
      %p92 = por %p90, %p91
      %p93 = scmp.ne.s32.totalorder %s84, %s85
      %p94 = scmp.eq.s32.totalorder %s18, 0
      %p95 = por %p93, %p94
      %p96 = scmp.ne.s32.totalorder %s84, %s85
      %p97 = scmp.eq.s32.totalorder %s19, 1
      %p98 = por %p96, %p97
      %p100 = scmp.ne.s32.totalorder %s85, %s99
      %p101 = scmp.eq.s32.totalorder %s19, 0
      %p102 = por %p100, %p101
      %s103 = ssub.s32 %s20, %s32
      %s104 = ssub.s32 %s21, %s28
      %s105 = sor.u32 %s103, %s104
      %p106 = scmp.eq.s32.totalorder %s105, 0
      %s108 = sadd.s32 %s107, 1
      %s109 = scalar_select %p106, %s107, %s108
      %p112 = pneg %p106
      %p113 = scmp.eq.s32.totalorder %s13, 1
      %p114 = por %p112, %p113
      %p115 = scmp.ne.s32.totalorder %s107, %s110
      %p116 = scmp.eq.s32.totalorder %s13, 0
      %p117 = por %p115, %p116
      %p118 = scmp.ne.s32.totalorder %s107, %s110
      %p119 = scmp.eq.s32.totalorder %s18, 1
      %p120 = por %p118, %p119
      %p121 = scmp.ne.s32.totalorder %s110, %s111
      %p122 = scmp.eq.s32.totalorder %s18, 0
      %p123 = por %p121, %p122
      %p124 = scmp.ne.s32.totalorder %s110, %s111
      %p125 = scmp.eq.s32.totalorder %s19, 1
      %p126 = por %p124, %p125
      %p128 = scmp.ne.s32.totalorder %s111, %s127
      %p129 = scmp.eq.s32.totalorder %s19, 0
      %p130 = por %p128, %p129
      %p131 = scmp.le.s32.totalorder 1, %s13
      %p132 = scmp.lt.s32.totalorder %s13, 3
      %p133 = pnand %p131, %p132
      %p134 = pneg %p133
      // Predicated region
      $region9: #{tpu_custom_call.1} parent=5 // pred_check
        _
      $region10: #{tpu_custom_call.1} parent=5 // pred_check_branch
        %136 = sbr.rel (%p133) target = $region12
      $region11: #{tpu_custom_call.1} parent=5 // pred_region
        %s137 = ssub.s32 %s13, 1
        // Predicated region
        $region13: #{tpu_custom_call.1} parent=11 // pred_check
          %p138 = pneg %p74
        $region14: #{tpu_custom_call.1} parent=11 // pred_check_branch
          %140 = sbr.rel (%p138) target = $region16
        $region15: #{tpu_custom_call.1} parent=11 // pred_region
          %s142 = ssub.s32 3456, 3456
          %143 = vsyncadd [#allocation3], %s142
          %s144 = sshll.u32 [#allocation2], 4
          %s145 = int_to_ptr.vmem [resolvable:$true] %s144
          %150 = dma.hbm_to_vmem [thread:$0]  %s1, 3456, %s145, [#allocation3], 128, 128, 8
        $region16: #{tpu_custom_call.1} parent=11 // pred_fallthru
          _
        // Predicated region
        $region17: #{tpu_custom_call.1} parent=11 // pred_check
          %p151 = pneg %p95
        $region18: #{tpu_custom_call.1} parent=11 // pred_check_branch
          %153 = sbr.rel (%p151) target = $region20
        $region19: #{tpu_custom_call.1} parent=11 // pred_region
          _
        $region20: #{tpu_custom_call.1} parent=11 // pred_fallthru
          _
      $region12: #{tpu_custom_call.1} parent=5 // pred_fallthru
        _
      %p154 = scmp.lt.s32.totalorder %s13, 2
      // Predicated region
      $region21: #{tpu_custom_call.1} parent=5 // pred_check
        %p155 = pneg %p154
      $region22: #{tpu_custom_call.1} parent=5 // pred_check_branch
        %157 = sbr.rel (%p155) target = $region24
      $region23: #{tpu_custom_call.1} parent=5 // pred_region
        // Predicated region
        $region25: #{tpu_custom_call.1} parent=23 // pred_check
          %p158 = pneg %p47
        $region26: #{tpu_custom_call.1} parent=23 // pred_check_branch
          %160 = sbr.rel (%p158) target = $region28
        $region27: #{tpu_custom_call.1} parent=23 // pred_region
          %p161 = scmp.lt.s32.totalorder %s20, 1
          %s162 = scalar_select %p161, %s20, 1
          %p163 = scmp.lt.s32.totalorder %s21, 0
          %s164 = scalar_select %p163, %s21, 0
          %s165 = smul.addr %s164, 3
          %s166 = smul.addr %s162, 3
          %s167 = sadd.s32 %s165, %s166
          %s168 = smul.addr %s167, 8
          %s169 = scalar_lea.vmem %s0, %s168
        $region28: #{tpu_custom_call.1} parent=23 // pred_fallthru
          _
      $region24: #{tpu_custom_call.1} parent=5 // pred_fallthru
        _
      %p170 = scmp.le.s32.totalorder 1, %s13
      %p171 = scmp.lt.s32.totalorder %s13, 3
      %p172 = pnand %p170, %p171
      %p173 = pneg %p172
      // Predicated region
      $region29: #{tpu_custom_call.1} parent=5 // pred_check
        _
      $region30: #{tpu_custom_call.1} parent=5 // pred_check_branch
        %175 = sbr.rel (%p172) target = $region32
      $region31: #{tpu_custom_call.1} parent=5 // pred_region
        %s176 = ssub.s32 %s13, 1
        // Predicated region
        $region33: #{tpu_custom_call.1} parent=31 // pred_check
          %p177 = pneg %p74
        $region34: #{tpu_custom_call.1} parent=31 // pred_check_branch
          %179 = sbr.rel (%p177) target = $region36
        $region35: #{tpu_custom_call.1} parent=31 // pred_region
          %180 = dma.done [#allocation3], 3456
        $region36: #{tpu_custom_call.1} parent=31 // pred_fallthru
          _
        %p181 = scmp.lt.s32.totalorder %s22, 1
        %s182 = scalar_select %p181, %s22, 1
        %p183 = scmp.lt.s32.totalorder %s23, 0
        %s184 = scalar_select %p183, %s23, 0
        %s185 = smul.addr %s184, 3
        %s186 = smul.addr %s182, 3
        %s187 = sadd.s32 %s185, %s186
        %s188 = smul.addr %s187, 8
        %s189 = scalar_lea.vmem %s0, %s188
        %p190 = pneg %p53
        %p191 = pneg %p50
        %p192 = pneg %p74
        %p193 = pneg %p71
        %p194 = pneg %p95
        %p195 = pneg %p92
        %p196 = pneg %p123
        %p197 = pneg %p120
        %s198 = sand.u32 %s110, 1
        %s199 = scalar_lea.sflag [#allocation4], %s198
        %s200 = sand.u32 %s110, 1
        %s201 = smul.addr %s200, 16
        %s202 = scalar_lea.vmem [#allocation5], %s201
        %p203 = scmp.lt.s32.totalorder %s22, 1
        %s204 = scalar_select %p203, %s22, 1
        %p205 = scmp.lt.s32.totalorder %s23, 0
        %s206 = scalar_select %p205, %s23, 0
        %s207 = smul.addr %s206, 3
        %s208 = smul.addr %s204, 3
        %s209 = sadd.s32 %s207, %s208
        %s210 = smul.addr %s209, 8
        %s211 = scalar_lea.vmem %s0, %s210
        %v212 = vld [vmem:[%s211] sm:$0xff]
        %v213 = vld [vmem:[%s211 + $0x8] sm:$0xff]
        %v214 = vld [vmem:[%s211 + $0x10] sm:$0x3]
        %v215 = vld [vmem:[#allocation2] sm:$0xff]
        %v216 = vld [vmem:[#allocation2 + $0x8] sm:$0xff]
        %v217 = vld [vmem:[#allocation2 + $0x10] sm:$0xff]
        %v218 = vld [vmem:[#allocation2 + $0x18] sm:$0xff]
        %v219 = vld [vmem:[#allocation2 + $0x20] sm:$0xff]
        %v220 = vld [vmem:[#allocation2 + $0x28] sm:$0xff]
        %v221 = vld [vmem:[#allocation2 + $0x30] sm:$0xff]
        %v222 = vld [vmem:[#allocation2 + $0x38] sm:$0xff]
        %v223 = vld [vmem:[#allocation2 + $0x40] sm:$0xff]
        %v224 = vld [vmem:[#allocation2 + $0x48] sm:$0xff]
        %v225 = vld [vmem:[#allocation2 + $0x50] sm:$0xff]
        %v226 = vld [vmem:[#allocation2 + $0x58] sm:$0xff]
        %v227 = vld [vmem:[#allocation2 + $0x60] sm:$0xff]
        %v228 = vld [vmem:[#allocation2 + $0x68] sm:$0xff]
        %v229 = vld [vmem:[#allocation2 + $0x70] sm:$0xff]
        %v230 = vld [vmem:[#allocation2 + $0x78] sm:$0xff]
        %v231 = vld [vmem:[#allocation2 + $0x80] sm:$0xff]
        %v232 = vld [vmem:[#allocation2 + $0x88] sm:$0xff]
        %v233 = vld [vmem:[#allocation2 + $0x90] sm:$0xff]
        %v234 = vld [vmem:[#allocation2 + $0x98] sm:$0xff]
        %v235 = vld [vmem:[#allocation2 + $0xa0] sm:$0xff]
        %v236 = vld [vmem:[#allocation2 + $0xa8] sm:$0xff]
        %v237 = vld [vmem:[#allocation2 + $0xb0] sm:$0xff]
        %v238 = vld [vmem:[#allocation2 + $0xb8] sm:$0xff]
        %v239 = vld [vmem:[#allocation2 + $0xc0] sm:$0xff]
        %v240 = vld [vmem:[#allocation2 + $0xc8] sm:$0xff]
        %v241 = vld [vmem:[#allocation2 + $0xd0] sm:$0xff]
        %vm245 = vcmask 1046528
        %v246 = vrot.slane %v212, 1
        %v247 = vrot.slane %v213, 1
        %v248 = vsel %vm245, %v246, %v247
        %v249 = vrot.slane %v214, 1
        %v250 = vsel %vm245, %v247, %v249
        %vm251 = vcmask 588800
        %v252 = vsel %vm251, %v248, 0
        %v254 = vsel %vm251, %v250, 0
        %256 = vmatprep.subr.mxu0 0.0
        %257 = vmatpush1.msra.mxu0 %v224
        %258 = vmatprep.subr.mxu0 0.0
        %259 = vmatpush1.msra.mxu0 %v225
        %260 = vmatprep.subr.mxu0 0.0
        %261 = vmatpush1.msra.mxu0 %v226
        %262 = vmatprep.subr.mxu0 0.0
        %263 = vmatpush1.msra.mxu0 %v227
        %264 = vmatprep.subr.mxu0 0.0
        %265 = vmatpush1.msra.mxu0 %v228
        %266 = vmatprep.subr.mxu0 0.0
        %267 = vmatpush1.msra.mxu0 %v229
        %268 = vmatprep.subr.mxu0 0.0
        %269 = vmatpush1.msra.mxu0 %v230
        %270 = vmatprep.subr.mxu0 0.0
        %271 = vmatpush1.msra.mxu0 %v231
        %272 = vmatprep.subr.mxu0 0.0
        %273 = vmatpush1.msra.mxu0 %v232
        %274 = vmatprep.subr.mxu0 0.0
        %275 = vmatpush1.msra.mxu0 0.0
        %276 = vmatprep.subr.mxu0 0.0
        %277 = vmatpush1.msra.mxu0 0.0
        %278 = vmatprep.subr.mxu0 0.0
        %279 = vmatpush1.msra.mxu0 0.0
        %280 = vmatprep.subr.mxu0 0.0
        %281 = vmatpush1.msra.mxu0 0.0
        %282 = vmatprep.subr.mxu0 0.0
        %283 = vmatpush1.msra.mxu0 0.0
        %284 = vmatprep.subr.mxu0 0.0
        %285 = vmatpush1.msra.mxu0 0.0
        %286 = vmatprep.subr.mxu0 0.0
        %287 = vmatpush1.msra.mxu0 0.0
        %288 = vmatprep.subr.mxu0 0.0
        %289 = vmatpush1.msra.mxu0 0.0
        %290 = vmatprep.subr.mxu0 0.0
        %291 = vmatpush1.msra.mxu0 0.0
        %292 = vmatprep.subr.mxu0 0.0
        %293 = vmatpush1.msra.mxu0 0.0
        %294 = vmatprep.subr.mxu0 0.0
        %295 = vmatpush1.msra.mxu0 0.0
        %296 = vmatprep.subr.mxu0 0.0
        %297 = vmatpush1.msra.mxu0 0.0
        %298 = vmatprep.subr.mxu0 0.0
        %299 = vmatpush1.msra.mxu0 0.0
        %300 = vmatprep.subr.mxu0 0.0
        %301 = vmatpush1.msra.mxu0 0.0
        %302 = vmatprep.subr.mxu0 0.0
        %303 = vmatpush1.msra.mxu0 0.0
        %304 = vmatprep.subr.mxu0 0.0
        %305 = vmatpush1.msra.mxu0 0.0
        %306 = vmatprep.subr.mxu0 0.0
        %307 = vmatpush1.msra.mxu0 0.0
        %308 = vmatprep.subr.mxu0 0.0
        %309 = vmatpush1.msra.mxu0 0.0
        %310 = vmatprep.subr.mxu0 0.0
        %311 = vmatpush1.msra.mxu0 0.0
        %312 = vmatprep.subr.mxu0 0.0
        %313 = vmatpush1.msra.mxu0 0.0
        %314 = vmatprep.subr.mxu0 0.0
        %315 = vmatpush1.msra.mxu0 0.0
        %316 = vmatprep.subr.mxu0 0.0
        %317 = vmatpush1.msra.mxu0 0.0
        %318 = vmatprep.subr.mxu0 0.0
        %319 = vmatpush1.msra.mxu0 0.0
        %320 = vmatprep.mubr.f32.mxu0 0.0
        %321 = vmatmul.mubr.f32.gmra.mrb[0].mxu0 %v252
        %v322 = vpop.f32.mrb[0].mxu0
        %v323 = vadd.f32 0.0, %v322
        %v324 = vpop.f32.mrb[0].mxu0
        %325 = vmatprep.mubr.f32.mxu0 0.0
        %326 = vmatmul.mubr.f32.gmra.mrb[0].mxu0 %v254
        %v327 = vpop.f32.mrb[0].mxu0
        %v328 = vadd.f32 0.0, %v327
        %v329 = vpop.f32.mrb[0].mxu0
        %330 = vdwg.mxu0
        %v331 = vsel %vm251, %v212, 0
        %v333 = vsel %vm251, %v213, 0
        %335 = vmatprep.subr.mxu0 0.0
        %336 = vmatpush1.msra.mxu0 %v215
        %337 = vmatprep.subr.mxu0 0.0
        %338 = vmatpush1.msra.mxu0 %v216
        %339 = vmatprep.subr.mxu0 0.0
        %340 = vmatpush1.msra.mxu0 %v217
        %341 = vmatprep.subr.mxu0 0.0
        %342 = vmatpush1.msra.mxu0 %v218
        %343 = vmatprep.subr.mxu0 0.0
        %344 = vmatpush1.msra.mxu0 %v219
        %345 = vmatprep.subr.mxu0 0.0
        %346 = vmatpush1.msra.mxu0 %v220
        %347 = vmatprep.subr.mxu0 0.0
        %348 = vmatpush1.msra.mxu0 %v221
        %349 = vmatprep.subr.mxu0 0.0
        %350 = vmatpush1.msra.mxu0 %v222
        %351 = vmatprep.subr.mxu0 0.0
        %352 = vmatpush1.msra.mxu0 %v223
        %353 = vmatprep.subr.mxu0 0.0
        %354 = vmatpush1.msra.mxu0 0.0
        %355 = vmatprep.subr.mxu0 0.0
        %356 = vmatpush1.msra.mxu0 0.0
        %357 = vmatprep.subr.mxu0 0.0
        %358 = vmatpush1.msra.mxu0 0.0
        %359 = vmatprep.subr.mxu0 0.0
        %360 = vmatpush1.msra.mxu0 0.0
        %361 = vmatprep.subr.mxu0 0.0
        %362 = vmatpush1.msra.mxu0 0.0
        %363 = vmatprep.subr.mxu0 0.0
        %364 = vmatpush1.msra.mxu0 0.0
        %365 = vmatprep.subr.mxu0 0.0
        %366 = vmatpush1.msra.mxu0 0.0
        %367 = vmatprep.subr.mxu0 0.0
        %368 = vmatpush1.msra.mxu0 0.0
        %369 = vmatprep.subr.mxu0 0.0
        %370 = vmatpush1.msra.mxu0 0.0
        %371 = vmatprep.subr.mxu0 0.0
        %372 = vmatpush1.msra.mxu0 0.0
        %373 = vmatprep.subr.mxu0 0.0
        %374 = vmatpush1.msra.mxu0 0.0
        %375 = vmatprep.subr.mxu0 0.0
        %376 = vmatpush1.msra.mxu0 0.0
        %377 = vmatprep.subr.mxu0 0.0
        %378 = vmatpush1.msra.mxu0 0.0
        %379 = vmatprep.subr.mxu0 0.0
        %380 = vmatpush1.msra.mxu0 0.0
        %381 = vmatprep.subr.mxu0 0.0
        %382 = vmatpush1.msra.mxu0 0.0
        %383 = vmatprep.subr.mxu0 0.0
        %384 = vmatpush1.msra.mxu0 0.0
        %385 = vmatprep.subr.mxu0 0.0
        %386 = vmatpush1.msra.mxu0 0.0
        %387 = vmatprep.subr.mxu0 0.0
        %388 = vmatpush1.msra.mxu0 0.0
        %389 = vmatprep.subr.mxu0 0.0
        %390 = vmatpush1.msra.mxu0 0.0
        %391 = vmatprep.subr.mxu0 0.0
        %392 = vmatpush1.msra.mxu0 0.0
        %393 = vmatprep.subr.mxu0 0.0
        %394 = vmatpush1.msra.mxu0 0.0
        %395 = vmatprep.subr.mxu0 0.0
        %396 = vmatpush1.msra.mxu0 0.0
        %397 = vmatprep.subr.mxu0 0.0
        %398 = vmatpush1.msra.mxu0 0.0
        %399 = vmatprep.mubr.f32.mxu0 0.0
        %400 = vmatmul.mubr.f32.gmra.mrb[0].mxu0 %v331
        %v401 = vpop.f32.mrb[0].mxu0
        %v402 = vadd.f32 %v323, %v401
        %v403 = vpop.f32.mrb[0].mxu0
        %404 = vmatprep.mubr.f32.mxu0 0.0
        %405 = vmatmul.mubr.f32.gmra.mrb[0].mxu0 %v333
        %v406 = vpop.f32.mrb[0].mxu0
        %v407 = vadd.f32 %v328, %v406
        %v408 = vpop.f32.mrb[0].mxu0
        %409 = vdwg.mxu0
        %vm410 = vcmask 1045504
        %v411 = vrot.slane %v212, 2
        %v412 = vrot.slane %v213, 2
        %v413 = vsel %vm410, %v411, %v412
        %v414 = vrot.slane %v214, 2
        %v415 = vsel %vm410, %v412, %v414
        %v416 = vsel %vm251, %v413, 0
        %v418 = vsel %vm251, %v415, 0
        %420 = vmatprep.subr.mxu0 0.0
        %421 = vmatpush1.msra.mxu0 %v233
        %422 = vmatprep.subr.mxu0 0.0
        %423 = vmatpush1.msra.mxu0 %v234
        %424 = vmatprep.subr.mxu0 0.0
        %425 = vmatpush1.msra.mxu0 %v235
        %426 = vmatprep.subr.mxu0 0.0
        %427 = vmatpush1.msra.mxu0 %v236
        %428 = vmatprep.subr.mxu0 0.0
        %429 = vmatpush1.msra.mxu0 %v237
        %430 = vmatprep.subr.mxu0 0.0
        %431 = vmatpush1.msra.mxu0 %v238
        %432 = vmatprep.subr.mxu0 0.0
        %433 = vmatpush1.msra.mxu0 %v239
        %434 = vmatprep.subr.mxu0 0.0
        %435 = vmatpush1.msra.mxu0 %v240
        %436 = vmatprep.subr.mxu0 0.0
        %437 = vmatpush1.msra.mxu0 %v241
        %438 = vmatprep.subr.mxu0 0.0
        %439 = vmatpush1.msra.mxu0 0.0
        %440 = vmatprep.subr.mxu0 0.0
        %441 = vmatpush1.msra.mxu0 0.0
        %442 = vmatprep.subr.mxu0 0.0
        %443 = vmatpush1.msra.mxu0 0.0
        %444 = vmatprep.subr.mxu0 0.0
        %445 = vmatpush1.msra.mxu0 0.0
        %446 = vmatprep.subr.mxu0 0.0
        %447 = vmatpush1.msra.mxu0 0.0
        %448 = vmatprep.subr.mxu0 0.0
        %449 = vmatpush1.msra.mxu0 0.0
        %450 = vmatprep.subr.mxu0 0.0
        %451 = vmatpush1.msra.mxu0 0.0
        %452 = vmatprep.subr.mxu0 0.0
        %453 = vmatpush1.msra.mxu0 0.0
        %454 = vmatprep.subr.mxu0 0.0
        %455 = vmatpush1.msra.mxu0 0.0
        %456 = vmatprep.subr.mxu0 0.0
        %457 = vmatpush1.msra.mxu0 0.0
        %458 = vmatprep.subr.mxu0 0.0
        %459 = vmatpush1.msra.mxu0 0.0
        %460 = vmatprep.subr.mxu0 0.0
        %461 = vmatpush1.msra.mxu0 0.0
        %462 = vmatprep.subr.mxu0 0.0
        %463 = vmatpush1.msra.mxu0 0.0
        %464 = vmatprep.subr.mxu0 0.0
        %465 = vmatpush1.msra.mxu0 0.0
        %466 = vmatprep.subr.mxu0 0.0
        %467 = vmatpush1.msra.mxu0 0.0
        %468 = vmatprep.subr.mxu0 0.0
        %469 = vmatpush1.msra.mxu0 0.0
        %470 = vmatprep.subr.mxu0 0.0
        %471 = vmatpush1.msra.mxu0 0.0
        %472 = vmatprep.subr.mxu0 0.0
        %473 = vmatpush1.msra.mxu0 0.0
        %474 = vmatprep.subr.mxu0 0.0
        %475 = vmatpush1.msra.mxu0 0.0
        %476 = vmatprep.subr.mxu0 0.0
        %477 = vmatpush1.msra.mxu0 0.0
        %478 = vmatprep.subr.mxu0 0.0
        %479 = vmatpush1.msra.mxu0 0.0
        %480 = vmatprep.subr.mxu0 0.0
        %481 = vmatpush1.msra.mxu0 0.0
        %482 = vmatprep.subr.mxu0 0.0
        %483 = vmatpush1.msra.mxu0 0.0
        %484 = vmatprep.mubr.f32.mxu0 0.0
        %485 = vmatmul.mubr.f32.gmra.mrb[0].mxu0 %v416
        %v486 = vpop.f32.mrb[0].mxu0
        %v487 = vadd.f32 0.0, %v486
        %v488 = vpop.f32.mrb[0].mxu0
        %489 = vmatprep.mubr.f32.mxu0 0.0
        %490 = vmatmul.mubr.f32.gmra.mrb[0].mxu0 %v418
        %v491 = vpop.f32.mrb[0].mxu0
        %v492 = vadd.f32 0.0, %v491
        %v493 = vpop.f32.mrb[0].mxu0
        %494 = vdwg.mxu0
        %v495 = vadd.f32 %v402, %v487
        %v496 = vadd.f32 %v407, %v492
        %v497 = vld [vmem:[%s2] sm:$0x1]
        %v499 = vlaneseq
        %v500 = vshrl.u32 %v499, 7
        %v501 = vsub.s32 0, %v500
        %v502 = vrot.slane %v497, %v501
        %v504 = vadd.f32 %v495, %v502
        %v505 = vadd.f32 %v496, %v502
        %506 = vst [vmem:[%s202] sm:$0xff] %v504
        %507 = vst [vmem:[%s202 + $0x8] sm:$0xff] %v505
        %s508 = sand.u32 %s110, 1
        %s509 = scalar_lea.sflag [#allocation4], %s508
        %s510 = sand.u32 %s110, 1
        %s511 = smul.addr %s510, 16
        %s512 = scalar_lea.vmem [#allocation5], %s511
        // Predicated region
        $region37: #{tpu_custom_call.1} parent=31 // pred_check
          %p513 = pneg %p120
        $region38: #{tpu_custom_call.1} parent=31 // pred_check_branch
          %515 = sbr.rel (%p513) target = $region40
        $region39: #{tpu_custom_call.1} parent=31 // pred_region
          %s517 = ssub.s32 256, 256
          %518 = vsyncadd %s509, %s517
          %s519 = smul.addr %s23, 2
          %s520 = smul.addr %s22, 2
          %s521 = sadd.s32 %s519, %s520
          %s522 = smul.addr %s521, 128
          %s523 = scalar_lea.hbm %s3, %s522
          %s524 = sshll.u32 %s512, 4
          %s525 = int_to_ptr.vmem [resolvable:$true] %s524
          %530 = dma.vmem_to_hbm [thread:$0]  %s525, 256, %s523, %s509, 128, 128, 8
        $region40: #{tpu_custom_call.1} parent=31 // pred_fallthru
          _
      $region32: #{tpu_custom_call.1} parent=5 // pred_fallthru
        _
      %p531 = scmp.le.s32.totalorder 2, %s13
      // Predicated region
      $region41: #{tpu_custom_call.1} parent=5 // pred_check
        %p532 = pneg %p531
      $region42: #{tpu_custom_call.1} parent=5 // pred_check_branch
        %534 = sbr.rel (%p532) target = $region44
      $region43: #{tpu_custom_call.1} parent=5 // pred_region
        %s535 = ssub.s32 %s13, 2
        // Predicated region
        $region45: #{tpu_custom_call.1} parent=43 // pred_check
          %p536 = pneg %p126
        $region46: #{tpu_custom_call.1} parent=43 // pred_check_branch
          %538 = sbr.rel (%p536) target = $region48
        $region47: #{tpu_custom_call.1} parent=43 // pred_region
          %s539 = sand.u32 %s111, 1
          %s540 = scalar_lea.sflag [#allocation4], %s539
          %s541 = sand.u32 %s111, 1
          %s542 = smul.addr %s541, 16
          %s543 = scalar_lea.vmem [#allocation5], %s542
          %544 = dma.done %s540, 256
        $region48: #{tpu_custom_call.1} parent=43 // pred_fallthru
          _
      $region44: #{tpu_custom_call.1} parent=5 // pred_fallthru
        _
    $region6: #{tpu_custom_call.1} parent=1 // loop_footer
      %s17 = sadd.s32 1, %s13
    $region7: #{tpu_custom_call.1} parent=1 // loop_footer_branch
      %12 = sbr.rel target = $region3
    $region8: #{tpu_custom_call.1} parent=1 // loop_exit
      _
    %545 = vsyncpa [#allocation3], 1
    %s546 = scalar_lea.sflag [#allocation3], 1
    %547 = vsyncpa %s546, 1
    %548 = vsyncpa [#allocation4], 1
    %s549 = scalar_lea.sflag [#allocation4], 1
    %550 = vsyncpa %s549, 1

</llo_original>
